<compile_context>
chip_gen: v7x
topology: tpu7x:2x2x1
jax: 0.10.0
libtpu: 0.0.40
codegen_flags: <defaults>
</compile_context>

<pallas_src>
import jax
import jax.numpy as jnp
from jax import lax
from jax.experimental import pallas as pl
from jax.experimental.pallas import tpu as pltpu


# ----------------------------- Pallas kernels ------------------------------

def _make_conv_bn_relu_wpool_kernel(R, Wp, C, wo_is_odd):
    """conv (matmul) + folded-BN shift + ReLU + 3-tap/stride-2 W-pool epilogue.

    p_ref: (TM, K) bf16 patches, TM = R*2*Wp, parity-ordered per conv row.
    w_ref: (K, C) bf16 weights with BN scale folded in.
    shift_ref: (1, C) f32 BN shift.
    o_ref: (R, Wp, C) f32 W-pooled conv+BN+ReLU rows.
    """
    def kernel(p_ref, w_ref, shift_ref, o_ref):
        acc = jnp.dot(p_ref[...], w_ref[...],
                      preferred_element_type=jnp.float32)        # MXU, f32 accum
        y = jnp.maximum(acc + shift_ref[...], 0.0)               # (R*2*Wp, C)
        y = y.reshape(R, 2 * Wp, C)                              # [even | odd] cols
        even = y[:, :Wp, :]                                      # conv cols 0,2,...
        odd = y[:, Wp:, :]                                       # conv cols 1,3,...
        left = y[:, Wp - 1:2 * Wp - 1, :]                        # = odd[wp-1] for wp>=1
        col = lax.broadcasted_iota(jnp.int32, (R, Wp, C), 1)
        left = jnp.where(col == 0, 0.0, left)                    # conv col -1 -> pad 0
        if wo_is_odd:
            odd = jnp.where(col == Wp - 1, 0.0, odd)             # dummy tap beyond Wo
        o_ref[...] = jnp.maximum(jnp.maximum(even, odd), left)
    return kernel


def _max3_kernel(a_ref, b_ref, c_ref, o_ref):
    # Elementwise 3-way max (H-direction of the 3x3/s2 maxpool), lane-dense blocks.
    o_ref[...] = jnp.maximum(jnp.maximum(a_ref[...], b_ref[...]), c_ref[...])


# ----------------------------- pallas_call wrappers -------------------------

def conv_bn_relu_wpool(patches_flat, w_scaled, bn_shift, *, R, Wp, Cout, wo_is_odd):
    Mpad, K = patches_flat.shape
    rows_pad = Mpad // (2 * Wp)
    num_blocks = rows_pad // R
    TM = R * 2 * Wp
    flops = 2 * Mpad * K * Cout
    bytes_accessed = (patches_flat.size * patches_flat.dtype.itemsize
                      + num_blocks * w_scaled.size * w_scaled.dtype.itemsize
                      + num_blocks * bn_shift.size * 4
                      + rows_pad * Wp * Cout * 4)
    return pl.pallas_call(
        _make_conv_bn_relu_wpool_kernel(R, Wp, Cout, wo_is_odd),
        out_shape=jax.ShapeDtypeStruct((rows_pad, Wp, Cout), jnp.float32),
        grid=(num_blocks,),
        in_specs=[
            pl.BlockSpec((TM, K), lambda i: (i, 0)),
            pl.BlockSpec((K, Cout), lambda i: (0, 0)),
            pl.BlockSpec((1, Cout), lambda i: (0, 0)),
        ],
        out_specs=pl.BlockSpec((R, Wp, Cout), lambda i: (i, 0, 0)),
        compiler_params=pltpu.CompilerParams(
            dimension_semantics=("parallel",),
            vmem_limit_bytes=32 * 1024 * 1024),
        cost_estimate=pl.CostEstimate(flops=flops, transcendentals=0,
                                      bytes_accessed=bytes_accessed),
    )(patches_flat, w_scaled, bn_shift)


def hpool_max3(t0, t1, t2):
    """Elementwise max of three equal-shape f32 arrays, tiled lane-dense (rows,128)."""
    shape = t0.shape
    total = t0.size
    lanes = 128
    rows = -(-total // lanes)
    trb = max(8, min(1024, (rows // 2 // 8) * 8))
    rows_pad = -(-rows // trb) * trb

    def to_rows(a):
        a = a.reshape(-1)
        a = jnp.pad(a, (0, rows_pad * lanes - total))
        return a.reshape(rows_pad, lanes)

    out = pl.pallas_call(
        _max3_kernel,
        out_shape=jax.ShapeDtypeStruct((rows_pad, lanes), jnp.float32),
        grid=(rows_pad // trb,),
        in_specs=[pl.BlockSpec((trb, lanes), lambda i: (i, 0))] * 3,
        out_specs=pl.BlockSpec((trb, lanes), lambda i: (i, 0)),
        compiler_params=pltpu.CompilerParams(
            dimension_semantics=("parallel",),
            vmem_limit_bytes=32 * 1024 * 1024),
    )(to_rows(t0), to_rows(t1), to_rows(t2))
    return out.reshape(-1)[:total].reshape(shape)


# ------------------------------ Forward pass -------------------------------

def basic_stem_forward(x_nchw, weight_oihw, gamma, beta, run_mean, run_var,
                       eps=1e-5):
    """BasicStem.forward with caffe_maxpool=False. Input/output are NCHW."""
    N, Cin, H, W = x_nchw.shape
    Cout, _, KH, KW = weight_oihw.shape
    stride, pad = 2, 3
    K = KH * KW * Cin

    Ho = (H + 2 * pad - KH) // stride + 1
    Wo = (W + 2 * pad - KW) // stride + 1
    Hp = (Ho - 1) // 2 + 1          # maxpool 3x3, stride 2, pad 1
    Wp = (Wo - 1) // 2 + 1

    # ---- im2col (layout glue in XLA; all compute stays in Pallas) ----
    # TODO(synk): in-kernel patch construction (DMA of raw NHWC row strips) is left
    # out; Cin=3 makes the raw-input layout lane-hostile for direct VMEM taps.
    x = jnp.transpose(x_nchw, (0, 2, 3, 1))                     # NHWC
    xp = jnp.pad(x, ((0, 0), (pad, pad), (pad, pad), (0, 0)))
    taps = []
    for kh in range(KH):
        for kw in range(KW):
            taps.append(xp[:, kh:kh + stride * (Ho - 1) + 1:stride,
                             kw:kw + stride * (Wo - 1) + 1:stride, :])
    patches = jnp.stack(taps, axis=3).reshape(N, Ho, Wo, K)     # K order (kh,kw,cin)

    # Parity-order conv columns per output row ([even | odd]) so the stride-2
    # W-pool inside the kernel needs only static sublane slices.
    even_p = patches[:, :, 0::2, :]                             # (N,Ho,Wp,K)
    odd_p = patches[:, :, 1::2, :]                              # (N,Ho,Wo//2,K)
    if Wo % 2 == 1:
        odd_p = jnp.pad(odd_p, ((0, 0), (0, 0), (0, 1), (0, 0)))
    pp = jnp.concatenate([even_p, odd_p], axis=2)               # (N,Ho,2*Wp,K)
    rows = N * Ho
    pp = pp.reshape(rows, 2 * Wp, K)

    # Tile size: R conv rows per grid step (TM = R*2*Wp patch rows, mult. of 8).
    target_tm = 1024
    r_target = max(4, target_tm // (2 * Wp))
    r_cap = max(4, (rows // 2 // 4) * 4) if rows >= 8 else 4
    R = max(4, (min(r_target, r_cap) // 4) * 4)
    rows_pad = -(-rows // R) * R
    pp = jnp.pad(pp, ((0, rows_pad - rows), (0, 0), (0, 0)))
    patches_flat = pp.reshape(rows_pad * 2 * Wp, K).astype(jnp.bfloat16)

    # Frozen BN: fold the scale into the weights, keep only the shift as epilogue.
    w_kc = jnp.transpose(weight_oihw, (2, 3, 1, 0)).reshape(K, Cout)
    bn_scale = gamma / jnp.sqrt(run_var + eps)
    bn_shift = (beta - run_mean * bn_scale).reshape(1, Cout).astype(jnp.float32)
    w_scaled = (w_kc * bn_scale[None, :]).astype(jnp.bfloat16)

    cm_pad = conv_bn_relu_wpool(patches_flat, w_scaled, bn_shift,
                                R=R, Wp=Wp, Cout=Cout, wo_is_odd=(Wo % 2 == 1))
    cm = cm_pad[:rows].reshape(N, Ho, Wp, Cout)                 # W-pooled conv+BN+ReLU

    # ---- H-direction of the 3x3/s2 maxpool (zero pad == -inf since post-ReLU) ----
    zcm = jnp.pad(cm, ((0, 0), (1, 1), (0, 0), (0, 0)))
    t0 = zcm[:, 0:2 * Hp - 1:2]                                 # conv rows 2*hp-1
    t1 = zcm[:, 1:2 * Hp:2]                                     # conv rows 2*hp
    t2 = zcm[:, 2:2 * Hp + 1:2]                                 # conv rows 2*hp+1
    out = hpool_max3(t0, t1, t2)                                # (N,Hp,Wp,Cout)
    return jnp.transpose(out, (0, 3, 1, 2))                     # back to NCHW


# ------------------------------ Reference -----------------------------------

def basic_stem_reference(x, w, gamma, beta, mean, var, eps=1e-5):
    y = lax.conv_general_dilated(
        x, w, window_strides=(2, 2), padding=((3, 3), (3, 3)),
        dimension_numbers=("NCHW", "OIHW", "NCHW"),
        precision=lax.Precision.HIGHEST)
    scale = (gamma / jnp.sqrt(var + eps)).reshape(1, -1, 1, 1)
    shift = (beta - mean * gamma / jnp.sqrt(var + eps)).reshape(1, -1, 1, 1)
    y = jnp.maximum(y * scale + shift, 0.0)
    return lax.reduce_window(
        y, -jnp.inf, lax.max,
        window_dimensions=(1, 1, 3, 3), window_strides=(1, 1, 2, 2),
        padding=((0, 0), (0, 0), (1, 1), (1, 1)))


# --------------------------------- Main -------------------------------------

if __name__ == "__main__":
    key = jax.random.PRNGKey(0)
    k_x, k_w, k_g, k_b, k_m, k_v = jax.random.split(key, 6)

    N, Cin, H, W = 2, 3, 16, 16
    Cout = 64

    x = jax.random.normal(k_x, (N, Cin, H, W), dtype=jnp.float32)
    weight = 0.05 * jax.random.normal(k_w, (Cout, Cin, 7, 7), dtype=jnp.float32)
    gamma = 1.0 + 0.1 * jax.random.normal(k_g, (Cout,), dtype=jnp.float32)
    beta = 0.1 * jax.random.normal(k_b, (Cout,), dtype=jnp.float32)
    run_mean = 0.1 * jax.random.normal(k_m, (Cout,), dtype=jnp.float32)
    run_var = jax.random.uniform(k_v, (Cout,), dtype=jnp.float32,
                                 minval=0.5, maxval=1.5)

    stem = jax.jit(basic_stem_forward)
    out = jax.block_until_ready(stem(x, weight, gamma, beta, run_mean, run_var))

    ref = jax.block_until_ready(
        basic_stem_reference(x, weight, gamma, beta, run_mean, run_var))

    assert out.shape == (N, Cout, 4, 4), out.shape
    # bf16 MXU operands (f32 accumulation) vs. f32 HIGHEST-precision reference.
    assert bool(jnp.allclose(out, ref, rtol=2e-2, atol=2e-2)), \
        float(jnp.max(jnp.abs(out - ref)))

    print("KERNEL_OK")
</pallas_src>

<mosaic_0001>
module attributes {stable_mosaic.version = 11 : i64} {
  func.func @kernel(%arg0: i32, %arg1: memref<64x147xbf16, #tpu.memory_space<vmem>>, %arg2: memref<147x64xbf16, #tpu.memory_space<vmem>>, %arg3: memref<1x64xf32, #tpu.memory_space<vmem>>, %arg4: memref<8x4x64xf32, #tpu.memory_space<vmem>>) attributes {dimension_semantics = [#tpu.dimension_semantics<parallel>], iteration_bounds = array<i64: 2>, scalar_prefetch = 0 : i64, scratch_operands = 0 : i64, tpu.core_type = #tpu.core_type<tc>, window_params = [{transform_indices = @transform_0, window_bounds = array<i64: 64, 147>}, {pipeline_mode = #tpu.pipeline_mode<synchronous>, transform_indices = @transform_1, window_bounds = array<i64: 147, 64>}, {pipeline_mode = #tpu.pipeline_mode<synchronous>, transform_indices = @transform_2, window_bounds = array<i64: 1, 64>}, {transform_indices = @transform_3, window_bounds = array<i64: 8, 4, 64>}]} {
    %c0 = arith.constant 0 : index
    %c0_0 = arith.constant 0 : index
    %0 = vector.load %arg1[%c0, %c0_0] : memref<64x147xbf16, #tpu.memory_space<vmem>>, vector<64x147xbf16>
    %c0_1 = arith.constant 0 : index
    %c0_2 = arith.constant 0 : index
    %1 = vector.load %arg2[%c0_1, %c0_2] : memref<147x64xbf16, #tpu.memory_space<vmem>>, vector<147x64xbf16>
    %cst = arith.constant dense<0.000000e+00> : vector<64x64xf32>
    %2 = tpu.matmul %0, %1, %cst {dimension_numbers = #tpu.dot_dimension_numbers<[1], [0], [0], [1], [0, 0, 1, 1], [], []>} : vector<64x147xbf16>, vector<147x64xbf16>, vector<64x64xf32> -> vector<64x64xf32>
    %c0_3 = arith.constant 0 : index
    %c0_4 = arith.constant 0 : index
    %3 = vector.load %arg3[%c0_3, %c0_4] : memref<1x64xf32, #tpu.memory_space<vmem>>, vector<1x64xf32>
    %4 = vector.broadcast %3 : vector<1x64xf32> to vector<64x64xf32>
    %5 = arith.addf %2, %4 : vector<64x64xf32>
    %cst_5 = arith.constant 0.000000e+00 : f32
    %6 = vector.broadcast %cst_5 : f32 to vector<64x64xf32>
    %7 = arith.maximumf %5, %6 : vector<64x64xf32>
    %8 = vector.shape_cast %7 : vector<64x64xf32> to vector<8x8x64xf32>
    %9 = vector.extract_strided_slice %8 {offsets = [0, 0, 0], sizes = [8, 4, 64], strides = [1, 1, 1]} : vector<8x8x64xf32> to vector<8x4x64xf32>
    %10 = vector.extract_strided_slice %8 {offsets = [0, 4, 0], sizes = [8, 4, 64], strides = [1, 1, 1]} : vector<8x8x64xf32> to vector<8x4x64xf32>
    %11 = vector.extract_strided_slice %8 {offsets = [0, 3, 0], sizes = [8, 4, 64], strides = [1, 1, 1]} : vector<8x8x64xf32> to vector<8x4x64xf32>
    %12 = tpu.iota {dimensions = array<i32: 1>} : vector<8x4x64xi32>
    %c0_i32 = arith.constant 0 : i32
    %13 = vector.broadcast %c0_i32 : i32 to vector<8x4x64xi32>
    %14 = arith.cmpi eq, %12, %13 : vector<8x4x64xi32>
    %cst_6 = arith.constant 0.000000e+00 : f32
    %15 = vector.broadcast %cst_6 : f32 to vector<8x4x64xf32>
    %16 = arith.select %14, %15, %11 : vector<8x4x64xi1>, vector<8x4x64xf32>
    %17 = arith.maximumf %9, %10 : vector<8x4x64xf32>
    %18 = arith.maximumf %17, %16 : vector<8x4x64xf32>
    %c0_7 = arith.constant 0 : index
    %c0_8 = arith.constant 0 : index
    %c0_9 = arith.constant 0 : index
    %19 = vector.load %arg4[%c0_7, %c0_8, %c0_9] : memref<8x4x64xf32, #tpu.memory_space<vmem>>, vector<8x4x64xf32>
    tpu.vector_store %arg4[%c0_7, %c0_8, %c0_9], %18 {strides = array<i32>} : memref<8x4x64xf32, #tpu.memory_space<vmem>>, vector<8x4x64xf32>,
    return
  }
  func.func @transform_0(%arg0: i32) -> (i32, i32) {
    %c0_i32 = arith.constant 0 : i32
    %c0_i32_0 = arith.constant 0 : i32
    return %arg0, %c0_i32 : i32, i32
  }
  func.func @transform_1(%arg0: i32) -> (i32, i32) {
    %c0_i32 = arith.constant 0 : i32
    %c0_i32_0 = arith.constant 0 : i32
    %c0_i32_1 = arith.constant 0 : i32
    return %c0_i32, %c0_i32_0 : i32, i32
  }
  func.func @transform_2(%arg0: i32) -> (i32, i32) {
    %c0_i32 = arith.constant 0 : i32
    %c0_i32_0 = arith.constant 0 : i32
    %c0_i32_1 = arith.constant 0 : i32
    return %c0_i32, %c0_i32_0 : i32, i32
  }
  func.func @transform_3(%arg0: i32) -> (i32, i32, i32) {
    %c0_i32 = arith.constant 0 : i32
    %c0_i32_0 = arith.constant 0 : i32
    %c0_i32_1 = arith.constant 0 : i32
    return %arg0, %c0_i32, %c0_i32_0 : i32, i32, i32
  }
}

module attributes {stable_mosaic.version = 11 : i64} {
  func.func @_max3_kernel(%arg0: i32, %arg1: memref<8x128xf32, #tpu.memory_space<vmem>>, %arg2: memref<8x128xf32, #tpu.memory_space<vmem>>, %arg3: memref<8x128xf32, #tpu.memory_space<vmem>>, %arg4: memref<8x128xf32, #tpu.memory_space<vmem>>) attributes {dimension_semantics = [#tpu.dimension_semantics<parallel>], iteration_bounds = array<i64: 2>, scalar_prefetch = 0 : i64, scratch_operands = 0 : i64, tpu.core_type = #tpu.core_type<tc>, window_params = [{transform_indices = @transform_0, window_bounds = array<i64: 8, 128>}, {transform_indices = @transform_1, window_bounds = array<i64: 8, 128>}, {transform_indices = @transform_2, window_bounds = array<i64: 8, 128>}, {transform_indices = @transform_3, window_bounds = array<i64: 8, 128>}]} {
    %c0 = arith.constant 0 : index
    %c0_0 = arith.constant 0 : index
    %0 = vector.load %arg1[%c0, %c0_0] : memref<8x128xf32, #tpu.memory_space<vmem>>, vector<8x128xf32>
    %c0_1 = arith.constant 0 : index
    %c0_2 = arith.constant 0 : index
    %1 = vector.load %arg2[%c0_1, %c0_2] : memref<8x128xf32, #tpu.memory_space<vmem>>, vector<8x128xf32>
    %2 = arith.maximumf %0, %1 : vector<8x128xf32>
    %c0_3 = arith.constant 0 : index
    %c0_4 = arith.constant 0 : index
    %3 = vector.load %arg3[%c0_3, %c0_4] : memref<8x128xf32, #tpu.memory_space<vmem>>, vector<8x128xf32>
    %4 = arith.maximumf %2, %3 : vector<8x128xf32>
    %c0_5 = arith.constant 0 : index
    %c0_6 = arith.constant 0 : index
    %5 = vector.load %arg4[%c0_5, %c0_6] : memref<8x128xf32, #tpu.memory_space<vmem>>, vector<8x128xf32>
    tpu.vector_store %arg4[%c0_5, %c0_6], %4 {strides = array<i32>} : memref<8x128xf32, #tpu.memory_space<vmem>>, vector<8x128xf32>,
    return
  }
  func.func @transform_0(%arg0: i32) -> (i32, i32) {
    %c0_i32 = arith.constant 0 : i32
    %c0_i32_0 = arith.constant 0 : i32
    return %arg0, %c0_i32 : i32, i32
  }
  func.func @transform_1(%arg0: i32) -> (i32, i32) {
    %c0_i32 = arith.constant 0 : i32
    %c0_i32_0 = arith.constant 0 : i32
    return %arg0, %c0_i32 : i32, i32
  }
  func.func @transform_2(%arg0: i32) -> (i32, i32) {
    %c0_i32 = arith.constant 0 : i32
    %c0_i32_0 = arith.constant 0 : i32
    return %arg0, %c0_i32 : i32, i32
  }
  func.func @transform_3(%arg0: i32) -> (i32, i32) {
    %c0_i32 = arith.constant 0 : i32
    %c0_i32_0 = arith.constant 0 : i32
    return %arg0, %c0_i32 : i32, i32
  }
}

</mosaic_0001>

<llo_original>
// kernel: basic_stem_forward.3
$region0: #{basic_stem_forward.3}
  #allocation0 [shape = 'u32[]', space=smem, size = 0x4, offset = 0x4, fixed_abs, tag = 'smem constant byte address 0x4 - core index']
  #allocation1 [shape = 'u32[144,128]{1,0:T(1,128)}', space=vmem, size = 0x12000, scoped, tag = 'internal scratch']
  %s0 = inlined_call_operand.vmem [shape: f32[16,128], index: 0, kind: input, shape index: {}]
  %s1 = inlined_call_operand.vmem [shape: f32[16,128], index: 1, kind: input, shape index: {}]
  %s2 = inlined_call_operand.vmem [shape: f32[16,128], index: 2, kind: input, shape index: {}]
  %s3 = inlined_call_operand.vmem [shape: f32[16,128], index: 3, kind: output, shape index: {}]
  %s4 = sld [smem:[#allocation0]]
  $region45: #{basic_stem_forward.3} parent=0
    _
  %s6 = ssub.s32 1, %s4
  %s7 = scalar_select 0, %s6, %s4
  loop: start=0, step=1, limit=4
  $region2: #{basic_stem_forward.3} parent=0 // loop_pre_header
    _
  $region3: #{basic_stem_forward.3} parent=0 // loop_header
    %s9 = sphi 0, %s13
    %p10 = scmp.ge.s32.totalorder %s9, 4
    %s19 = sphi 0, %s21
    %s22 = sphi 0, %s19
    %s23 = sphi 0, %s22
    %s39 = sphi 0, %s23
    %s45 = sphi 0, %s47
    %s48 = sphi 0, %s45
    %s49 = sphi 0, %s48
    %s65 = sphi 0, %s49
    %s71 = sphi 0, %s73
    %s74 = sphi 0, %s71
    %s75 = sphi 0, %s74
    %s91 = sphi 0, %s75
    %s97 = sphi 0, %s99
    %s100 = sphi 0, %s97
    %s101 = sphi 0, %s100
    %s117 = sphi 0, %s101
  $region4: #{basic_stem_forward.3} parent=0 // loop_header_branch
    %12 = sbr.rel (%p10) target = $region8
  $region5: #{basic_stem_forward.3} parent=0 // loop_body
    %s14 = ssub.s32 %s9, 1
    %s15 = ssub.s32 %s9, 2
    %s16 = sadd.s32 %s9, 1
    %s17 = ssub.s32 %s9, %s16
    %p18 = scmp.eq.s32.totalorder %s17, 0
    %s20 = sadd.s32 %s19, 1
    %s21 = scalar_select %p18, %s19, %s20
    %p24 = pneg %p18
    %p25 = scmp.eq.s32.totalorder %s9, 1
    %p26 = por %p24, %p25
    %p27 = scmp.ne.s32.totalorder %s19, %s22
    %p28 = scmp.eq.s32.totalorder %s9, 0
    %p29 = por %p27, %p28
    %p30 = scmp.ne.s32.totalorder %s19, %s22
    %p31 = scmp.eq.s32.totalorder %s14, 1
    %p32 = por %p30, %p31
    %p33 = scmp.ne.s32.totalorder %s22, %s23
    %p34 = scmp.eq.s32.totalorder %s14, 0
    %p35 = por %p33, %p34
    %p36 = scmp.ne.s32.totalorder %s22, %s23
    %p37 = scmp.eq.s32.totalorder %s15, 1
    %p38 = por %p36, %p37
    %p40 = scmp.ne.s32.totalorder %s23, %s39
    %p41 = scmp.eq.s32.totalorder %s15, 0
    %p42 = por %p40, %p41
    %s43 = ssub.s32 %s9, %s16
    %p44 = scmp.eq.s32.totalorder %s43, 0
    %s46 = sadd.s32 %s45, 1
    %s47 = scalar_select %p44, %s45, %s46
    %p50 = pneg %p44
    %p51 = scmp.eq.s32.totalorder %s9, 1
    %p52 = por %p50, %p51
    %p53 = scmp.ne.s32.totalorder %s45, %s48
    %p54 = scmp.eq.s32.totalorder %s9, 0
    %p55 = por %p53, %p54
    %p56 = scmp.ne.s32.totalorder %s45, %s48
    %p57 = scmp.eq.s32.totalorder %s14, 1
    %p58 = por %p56, %p57
    %p59 = scmp.ne.s32.totalorder %s48, %s49
    %p60 = scmp.eq.s32.totalorder %s14, 0
    %p61 = por %p59, %p60
    %p62 = scmp.ne.s32.totalorder %s48, %s49
    %p63 = scmp.eq.s32.totalorder %s15, 1
    %p64 = por %p62, %p63
    %p66 = scmp.ne.s32.totalorder %s49, %s65
    %p67 = scmp.eq.s32.totalorder %s15, 0
    %p68 = por %p66, %p67
    %s69 = ssub.s32 %s9, %s16
    %p70 = scmp.eq.s32.totalorder %s69, 0
    %s72 = sadd.s32 %s71, 1
    %s73 = scalar_select %p70, %s71, %s72
    %p76 = pneg %p70
    %p77 = scmp.eq.s32.totalorder %s9, 1
    %p78 = por %p76, %p77
    %p79 = scmp.ne.s32.totalorder %s71, %s74
    %p80 = scmp.eq.s32.totalorder %s9, 0
    %p81 = por %p79, %p80
    %p82 = scmp.ne.s32.totalorder %s71, %s74
    %p83 = scmp.eq.s32.totalorder %s14, 1
    %p84 = por %p82, %p83
    %p85 = scmp.ne.s32.totalorder %s74, %s75
    %p86 = scmp.eq.s32.totalorder %s14, 0
    %p87 = por %p85, %p86
    %p88 = scmp.ne.s32.totalorder %s74, %s75
    %p89 = scmp.eq.s32.totalorder %s15, 1
    %p90 = por %p88, %p89
    %p92 = scmp.ne.s32.totalorder %s75, %s91
    %p93 = scmp.eq.s32.totalorder %s15, 0
    %p94 = por %p92, %p93
    %s95 = ssub.s32 %s9, %s16
    %p96 = scmp.eq.s32.totalorder %s95, 0
    %s98 = sadd.s32 %s97, 1
    %s99 = scalar_select %p96, %s97, %s98
    %p102 = pneg %p96
    %p103 = scmp.eq.s32.totalorder %s9, 1
    %p104 = por %p102, %p103
    %p105 = scmp.ne.s32.totalorder %s97, %s100
    %p106 = scmp.eq.s32.totalorder %s9, 0
    %p107 = por %p105, %p106
    %p108 = scmp.ne.s32.totalorder %s97, %s100
    %p109 = scmp.eq.s32.totalorder %s14, 1
    %p110 = por %p108, %p109
    %p111 = scmp.ne.s32.totalorder %s100, %s101
    %p112 = scmp.eq.s32.totalorder %s14, 0
    %p113 = por %p111, %p112
    %p114 = scmp.ne.s32.totalorder %s100, %s101
    %p115 = scmp.eq.s32.totalorder %s15, 1
    %p116 = por %p114, %p115
    %p118 = scmp.ne.s32.totalorder %s101, %s117
    %p119 = scmp.eq.s32.totalorder %s15, 0
    %p120 = por %p118, %p119
    %p121 = scmp.le.s32.totalorder 1, %s9
    %p122 = scmp.lt.s32.totalorder %s9, 3
    %p123 = pnand %p121, %p122
    %p124 = pneg %p123
    // Predicated region
    $region9: #{basic_stem_forward.3} parent=5 // pred_check
      _
    $region10: #{basic_stem_forward.3} parent=5 // pred_check_branch
      %126 = sbr.rel (%p123) target = $region12
    $region11: #{basic_stem_forward.3} parent=5 // pred_region
      %s127 = ssub.s32 %s9, 1
    $region12: #{basic_stem_forward.3} parent=5 // pred_fallthru
      _
    %p128 = scmp.lt.s32.totalorder %s9, 2
    // Predicated region
    $region13: #{basic_stem_forward.3} parent=5 // pred_check
      %p129 = pneg %p128
    $region14: #{basic_stem_forward.3} parent=5 // pred_check_branch
      %131 = sbr.rel (%p129) target = $region16
    $region15: #{basic_stem_forward.3} parent=5 // pred_region
      // Predicated region
      $region17: #{basic_stem_forward.3} parent=15 // pred_check
        %p132 = pneg %p29
      $region18: #{basic_stem_forward.3} parent=15 // pred_check_branch
        %134 = sbr.rel (%p132) target = $region20
      $region19: #{basic_stem_forward.3} parent=15 // pred_region
        %p135 = scmp.lt.s32.totalorder %s9, 1
        %s136 = scalar_select %p135, %s9, 1
        %s137 = smul.addr %s136, 8
        %s138 = scalar_lea.vmem %s0, %s137
      $region20: #{basic_stem_forward.3} parent=15 // pred_fallthru
        _
      // Predicated region
      $region21: #{basic_stem_forward.3} parent=15 // pred_check
        %p139 = pneg %p55
      $region22: #{basic_stem_forward.3} parent=15 // pred_check_branch
        %141 = sbr.rel (%p139) target = $region24
      $region23: #{basic_stem_forward.3} parent=15 // pred_region
        %p142 = scmp.lt.s32.totalorder %s9, 1
        %s143 = scalar_select %p142, %s9, 1
        %s144 = smul.addr %s143, 8
        %s145 = scalar_lea.vmem %s1, %s144
      $region24: #{basic_stem_forward.3} parent=15 // pred_fallthru
        _
      // Predicated region
      $region25: #{basic_stem_forward.3} parent=15 // pred_check
        %p146 = pneg %p81
      $region26: #{basic_stem_forward.3} parent=15 // pred_check_branch
        %148 = sbr.rel (%p146) target = $region28
      $region27: #{basic_stem_forward.3} parent=15 // pred_region
        %p149 = scmp.lt.s32.totalorder %s9, 1
        %s150 = scalar_select %p149, %s9, 1
        %s151 = smul.addr %s150, 8
        %s152 = scalar_lea.vmem %s2, %s151
      $region28: #{basic_stem_forward.3} parent=15 // pred_fallthru
        _
    $region16: #{basic_stem_forward.3} parent=5 // pred_fallthru
      _
    %p153 = scmp.le.s32.totalorder 1, %s9
    %p154 = scmp.lt.s32.totalorder %s9, 3
    %p155 = pnand %p153, %p154
    %p156 = pneg %p155
    // Predicated region
    $region29: #{basic_stem_forward.3} parent=5 // pred_check
      _
    $region30: #{basic_stem_forward.3} parent=5 // pred_check_branch
      %158 = sbr.rel (%p155) target = $region32
    $region31: #{basic_stem_forward.3} parent=5 // pred_region
      %s159 = ssub.s32 %s9, 1
      %p160 = scmp.lt.s32.totalorder %s14, 1
      %s161 = scalar_select %p160, %s14, 1
      %s162 = smul.addr %s161, 8
      %s163 = scalar_lea.vmem %s0, %s162
      %p164 = pneg %p35
      %p165 = pneg %p32
      %p166 = scmp.lt.s32.totalorder %s14, 1
      %s167 = scalar_select %p166, %s14, 1
      %s168 = smul.addr %s167, 8
      %s169 = scalar_lea.vmem %s1, %s168
      %p170 = pneg %p61
      %p171 = pneg %p58
      %p172 = scmp.lt.s32.totalorder %s14, 1
      %s173 = scalar_select %p172, %s14, 1
      %s174 = smul.addr %s173, 8
      %s175 = scalar_lea.vmem %s2, %s174
      %p176 = pneg %p87
      %p177 = pneg %p84
      %p178 = pneg %p113
      %p179 = pneg %p110
      %p180 = scmp.lt.s32.totalorder %s14, 1
      %s181 = scalar_select %p180, %s14, 1
      %s182 = smul.addr %s181, 8
      %s183 = scalar_lea.vmem %s3, %s182
      %p184 = scmp.lt.s32.totalorder %s14, 1
      %s185 = scalar_select %p184, %s14, 1
      %s186 = smul.addr %s185, 8
      %s187 = scalar_lea.vmem %s0, %s186
      %p188 = scmp.lt.s32.totalorder %s14, 1
      %s189 = scalar_select %p188, %s14, 1
      %s190 = smul.addr %s189, 8
      %s191 = scalar_lea.vmem %s1, %s190
      %p192 = scmp.lt.s32.totalorder %s14, 1
      %s193 = scalar_select %p192, %s14, 1
      %s194 = smul.addr %s193, 8
      %s195 = scalar_lea.vmem %s2, %s194
      %p196 = scmp.lt.s32.totalorder %s14, 1
      %s197 = scalar_select %p196, %s14, 1
      %s198 = smul.addr %s197, 8
      %s199 = scalar_lea.vmem %s3, %s198
      %v200 = vld [vmem:[%s187] sm:$0xff]
      %v201 = vld [vmem:[%s191] sm:$0xff]
      %v202 = vmax.f32 %v200, %v201
      %v203 = vld [vmem:[%s195] sm:$0xff]
      %v204 = vmax.f32 %v202, %v203
      %205 = vst [vmem:[%s199] sm:$0xff] %v204
      %p206 = scmp.lt.s32.totalorder %s14, 1
      %s207 = scalar_select %p206, %s14, 1
      %s208 = smul.addr %s207, 8
      %s209 = scalar_lea.vmem %s3, %s208
      // Predicated region
      $region33: #{basic_stem_forward.3} parent=31 // pred_check
        %p210 = pneg %p110
      $region34: #{basic_stem_forward.3} parent=31 // pred_check_branch
        %212 = sbr.rel (%p210) target = $region36
      $region35: #{basic_stem_forward.3} parent=31 // pred_region
        _
      $region36: #{basic_stem_forward.3} parent=31 // pred_fallthru
        _
    $region32: #{basic_stem_forward.3} parent=5 // pred_fallthru
      _
    %p213 = scmp.le.s32.totalorder 2, %s9
    // Predicated region
    $region37: #{basic_stem_forward.3} parent=5 // pred_check
      %p214 = pneg %p213
    $region38: #{basic_stem_forward.3} parent=5 // pred_check_branch
      %216 = sbr.rel (%p214) target = $region40
    $region39: #{basic_stem_forward.3} parent=5 // pred_region
      %s217 = ssub.s32 %s9, 2
      // Predicated region
      $region41: #{basic_stem_forward.3} parent=39 // pred_check
        %p218 = pneg %p116
      $region42: #{basic_stem_forward.3} parent=39 // pred_check_branch
        %220 = sbr.rel (%p218) target = $region44
      $region43: #{basic_stem_forward.3} parent=39 // pred_region
        %p221 = scmp.lt.s32.totalorder %s15, 1
        %s222 = scalar_select %p221, %s15, 1
        %s223 = smul.addr %s222, 8
        %s224 = scalar_lea.vmem %s3, %s223
      $region44: #{basic_stem_forward.3} parent=39 // pred_fallthru
        _
    $region40: #{basic_stem_forward.3} parent=5 // pred_fallthru
      _
  $region6: #{basic_stem_forward.3} parent=0 // loop_footer
    %s13 = sadd.s32 1, %s9
  $region7: #{basic_stem_forward.3} parent=0 // loop_footer_branch
    %8 = sbr.rel target = $region3
  $region8: #{basic_stem_forward.3} parent=0 // loop_exit
    _

// kernel: basic_stem_forward.2
$region0: #{basic_stem_forward.2}
  #allocation0 [shape = 'u32[]', space=smem, size = 0x4, offset = 0x4, fixed_abs, tag = 'smem constant byte address 0x4 - core index']
  #allocation1 [shape = 'u32[144,128]{1,0:T(1,128)}', space=vmem, size = 0x12000, scoped, tag = 'internal scratch']
  %s0 = inlined_call_operand.vmem [shape: bf16[128,147], index: 0, kind: input, shape index: {}]
  %s1 = inlined_call_operand.vmem [shape: bf16[147,64], index: 1, kind: input, shape index: {}]
  %s2 = inlined_call_operand.vmem [shape: f32[1,64], index: 2, kind: input, shape index: {}]
  %s3 = inlined_call_operand.vmem [shape: f32[16,4,64], index: 3, kind: output, shape index: {}]
  %s4 = sld [smem:[#allocation0]]
  $region45: #{basic_stem_forward.2} parent=0
    _
  %s6 = ssub.s32 1, %s4
  %s7 = scalar_select 0, %s6, %s4
  loop: start=0, step=1, limit=4
  $region2: #{basic_stem_forward.2} parent=0 // loop_pre_header
    _
  $region3: #{basic_stem_forward.2} parent=0 // loop_header
    %s9 = sphi 0, %s13
    %p10 = scmp.ge.s32.totalorder %s9, 4
    %s19 = sphi 0, %s21
    %s22 = sphi 0, %s19
    %s23 = sphi 0, %s22
    %s39 = sphi 0, %s23
    %s43 = sphi 0, %s43
    %s45 = sphi 0, %s43
    %s46 = sphi 0, %s45
    %s60 = sphi 0, %s46
    %s64 = sphi 0, %s64
    %s66 = sphi 0, %s64
    %s67 = sphi 0, %s66
    %s81 = sphi 0, %s67
    %s87 = sphi 0, %s89
    %s90 = sphi 0, %s87
    %s91 = sphi 0, %s90
    %s107 = sphi 0, %s91
  $region4: #{basic_stem_forward.2} parent=0 // loop_header_branch
    %12 = sbr.rel (%p10) target = $region8
  $region5: #{basic_stem_forward.2} parent=0 // loop_body
    %s14 = ssub.s32 %s9, 1
    %s15 = ssub.s32 %s9, 2
    %s16 = sadd.s32 %s9, 1
    %s17 = ssub.s32 %s9, %s16
    %p18 = scmp.eq.s32.totalorder %s17, 0
    %s20 = sadd.s32 %s19, 1
    %s21 = scalar_select %p18, %s19, %s20
    %p24 = pneg %p18
    %p25 = scmp.eq.s32.totalorder %s9, 1
    %p26 = por %p24, %p25
    %p27 = scmp.ne.s32.totalorder %s19, %s22
    %p28 = scmp.eq.s32.totalorder %s9, 0
    %p29 = por %p27, %p28
    %p30 = scmp.ne.s32.totalorder %s19, %s22
    %p31 = scmp.eq.s32.totalorder %s14, 1
    %p32 = por %p30, %p31
    %p33 = scmp.ne.s32.totalorder %s22, %s23
    %p34 = scmp.eq.s32.totalorder %s14, 0
    %p35 = por %p33, %p34
    %p36 = scmp.ne.s32.totalorder %s22, %s23
    %p37 = scmp.eq.s32.totalorder %s15, 1
    %p38 = por %p36, %p37
    %p40 = scmp.ne.s32.totalorder %s23, %s39
    %p41 = scmp.eq.s32.totalorder %s15, 0
    %p42 = por %p40, %p41
    %s44 = sadd.s32 %s43, 1
    %p47 = scmp.eq.s32.totalorder %s9, 1
    %p48 = scmp.ne.s32.totalorder %s43, %s45
    %p49 = scmp.eq.s32.totalorder %s9, 0
    %p50 = por %p48, %p49
    %p51 = scmp.ne.s32.totalorder %s43, %s45
    %p52 = scmp.eq.s32.totalorder %s14, 1
    %p53 = por %p51, %p52
    %p54 = scmp.ne.s32.totalorder %s45, %s46
    %p55 = scmp.eq.s32.totalorder %s14, 0
    %p56 = por %p54, %p55
    %p57 = scmp.ne.s32.totalorder %s45, %s46
    %p58 = scmp.eq.s32.totalorder %s15, 1
    %p59 = por %p57, %p58
    %p61 = scmp.ne.s32.totalorder %s46, %s60
    %p62 = scmp.eq.s32.totalorder %s15, 0
    %p63 = por %p61, %p62
    %s65 = sadd.s32 %s64, 1
    %p68 = scmp.eq.s32.totalorder %s9, 1
    %p69 = scmp.ne.s32.totalorder %s64, %s66
    %p70 = scmp.eq.s32.totalorder %s9, 0
    %p71 = por %p69, %p70
    %p72 = scmp.ne.s32.totalorder %s64, %s66
    %p73 = scmp.eq.s32.totalorder %s14, 1
    %p74 = por %p72, %p73
    %p75 = scmp.ne.s32.totalorder %s66, %s67
    %p76 = scmp.eq.s32.totalorder %s14, 0
    %p77 = por %p75, %p76
    %p78 = scmp.ne.s32.totalorder %s66, %s67
    %p79 = scmp.eq.s32.totalorder %s15, 1
    %p80 = por %p78, %p79
    %p82 = scmp.ne.s32.totalorder %s67, %s81
    %p83 = scmp.eq.s32.totalorder %s15, 0
    %p84 = por %p82, %p83
    %s85 = ssub.s32 %s9, %s16
    %p86 = scmp.eq.s32.totalorder %s85, 0
    %s88 = sadd.s32 %s87, 1
    %s89 = scalar_select %p86, %s87, %s88
    %p92 = pneg %p86
    %p93 = scmp.eq.s32.totalorder %s9, 1
    %p94 = por %p92, %p93
    %p95 = scmp.ne.s32.totalorder %s87, %s90
    %p96 = scmp.eq.s32.totalorder %s9, 0
    %p97 = por %p95, %p96
    %p98 = scmp.ne.s32.totalorder %s87, %s90
    %p99 = scmp.eq.s32.totalorder %s14, 1
    %p100 = por %p98, %p99
    %p101 = scmp.ne.s32.totalorder %s90, %s91
    %p102 = scmp.eq.s32.totalorder %s14, 0
    %p103 = por %p101, %p102
    %p104 = scmp.ne.s32.totalorder %s90, %s91
    %p105 = scmp.eq.s32.totalorder %s15, 1
    %p106 = por %p104, %p105
    %p108 = scmp.ne.s32.totalorder %s91, %s107
    %p109 = scmp.eq.s32.totalorder %s15, 0
    %p110 = por %p108, %p109
    %p111 = scmp.le.s32.totalorder 1, %s9
    %p112 = scmp.lt.s32.totalorder %s9, 3
    %p113 = pnand %p111, %p112
    %p114 = pneg %p113
    // Predicated region
    $region9: #{basic_stem_forward.2} parent=5 // pred_check
      _
    $region10: #{basic_stem_forward.2} parent=5 // pred_check_branch
      %116 = sbr.rel (%p113) target = $region12
    $region11: #{basic_stem_forward.2} parent=5 // pred_region
      %s117 = ssub.s32 %s9, 1
      // Predicated region
      $region13: #{basic_stem_forward.2} parent=11 // pred_check
        %p118 = pneg %p56
      $region14: #{basic_stem_forward.2} parent=11 // pred_check_branch
        %120 = sbr.rel (%p118) target = $region16
      $region15: #{basic_stem_forward.2} parent=11 // pred_region
        _
      $region16: #{basic_stem_forward.2} parent=11 // pred_fallthru
        _
      // Predicated region
      $region17: #{basic_stem_forward.2} parent=11 // pred_check
        %p121 = pneg %p77
      $region18: #{basic_stem_forward.2} parent=11 // pred_check_branch
        %123 = sbr.rel (%p121) target = $region20
      $region19: #{basic_stem_forward.2} parent=11 // pred_region
        _
      $region20: #{basic_stem_forward.2} parent=11 // pred_fallthru
        _
    $region12: #{basic_stem_forward.2} parent=5 // pred_fallthru
      _
    %p124 = scmp.lt.s32.totalorder %s9, 2
    // Predicated region
    $region21: #{basic_stem_forward.2} parent=5 // pred_check
      %p125 = pneg %p124
    $region22: #{basic_stem_forward.2} parent=5 // pred_check_branch
      %127 = sbr.rel (%p125) target = $region24
    $region23: #{basic_stem_forward.2} parent=5 // pred_region
      // Predicated region
      $region25: #{basic_stem_forward.2} parent=23 // pred_check
        %p128 = pneg %p29
      $region26: #{basic_stem_forward.2} parent=23 // pred_check_branch
        %130 = sbr.rel (%p128) target = $region28
      $region27: #{basic_stem_forward.2} parent=23 // pred_region
        %s131 = smul.u32 8, %s9
        %p132 = scmp.lt.s32.totalorder %s131, 15
        %s133 = scalar_select %p132, %s131, 15
        %s134 = smul.addr %s133, 2
        %s135 = smul.addr %s134, 4
        %s136 = scalar_lea.vmem %s0, %s135
        %s137 = smul.u32 8, %s9
      $region28: #{basic_stem_forward.2} parent=23 // pred_fallthru
        _
    $region24: #{basic_stem_forward.2} parent=5 // pred_fallthru
      _
    %p138 = scmp.le.s32.totalorder 1, %s9
    %p139 = scmp.lt.s32.totalorder %s9, 3
    %p140 = pnand %p138, %p139
    %p141 = pneg %p140
    // Predicated region
    $region29: #{basic_stem_forward.2} parent=5 // pred_check
      _
    $region30: #{basic_stem_forward.2} parent=5 // pred_check_branch
      %143 = sbr.rel (%p140) target = $region32
    $region31: #{basic_stem_forward.2} parent=5 // pred_region
      %s144 = ssub.s32 %s9, 1
      %s145 = smul.u32 8, %s14
      %p146 = scmp.lt.s32.totalorder %s145, 15
      %s147 = scalar_select %p146, %s145, 15
      %s148 = smul.addr %s147, 2
      %s149 = smul.addr %s148, 4
      %s150 = scalar_lea.vmem %s0, %s149
      %p151 = pneg %p35
      %p152 = pneg %p32
      %p153 = pneg %p56
      %p154 = pneg %p53
      %p155 = pneg %p77
      %p156 = pneg %p74
      %p157 = pneg %p103
      %p158 = pneg %p100
      %s159 = smul.u32 8, %s14
      %p160 = scmp.lt.s32.totalorder %s159, 15
      %s161 = scalar_select %p160, %s159, 15
      %s162 = smul.addr %s161, 4
      %s163 = scalar_lea.vmem %s3, %s162
      %s164 = smul.u32 8, %s14
      %p165 = scmp.lt.s32.totalorder %s164, 15
      %s166 = scalar_select %p165, %s164, 15
      %s167 = smul.addr %s166, 2
      %s168 = smul.addr %s167, 4
      %s169 = scalar_lea.vmem %s0, %s168
      %s170 = smul.u32 8, %s14
      %s171 = smul.u32 8, %s14
      %p172 = scmp.lt.s32.totalorder %s171, 15
      %s173 = scalar_select %p172, %s171, 15
      %s174 = smul.addr %s173, 4
      %s175 = scalar_lea.vmem %s3, %s174
      %s176 = smul.u32 8, %s14
      %v178 = vld [vmem:[%s169] sm:$0xff]
      %v179 = vld [vmem:[%s169 + $0x8] sm:$0xff]
      %v180 = vld [vmem:[%s169 + $0x10] sm:$0xff]
      %v181 = vld [vmem:[%s169 + $0x18] sm:$0xff]
      %v182 = vld [vmem:[%s169 + $0x20] sm:$0xff]
      %v183 = vld [vmem:[%s169 + $0x28] sm:$0xff]
      %v184 = vld [vmem:[%s169 + $0x30] sm:$0xff]
      %v185 = vld [vmem:[%s169 + $0x38] sm:$0xff]
      %v186 = vld [vmem:[%s1] sm:$0xf]
      %v187 = vld [vmem:[%s1 + $0x4] sm:$0xf]
      %v188 = vld [vmem:[%s1 + $0x8] sm:$0xf]
      %v189 = vld [vmem:[%s1 + $0xc] sm:$0xf]
      %v190 = vld [vmem:[%s1 + $0x10] sm:$0xf]
      %v191 = vld [vmem:[%s1 + $0x14] sm:$0xf]
      %v192 = vld [vmem:[%s1 + $0x18] sm:$0xf]
      %v193 = vld [vmem:[%s1 + $0x1c] sm:$0xf]
      %v194 = vld [vmem:[%s1 + $0x20] sm:$0xf]
      %v195 = vld [vmem:[%s1 + $0x24] sm:$0xf]
      %v196 = vld [vmem:[%s1 + $0x28] sm:$0xf]
      %v197 = vld [vmem:[%s1 + $0x2c] sm:$0xf]
      %v198 = vld [vmem:[%s1 + $0x30] sm:$0xf]
      %v199 = vld [vmem:[%s1 + $0x34] sm:$0xf]
      %v200 = vld [vmem:[%s1 + $0x38] sm:$0xf]
      %v201 = vld [vmem:[%s1 + $0x3c] sm:$0xf]
      %v202 = vld [vmem:[%s1 + $0x40] sm:$0xf]
      %v203 = vld [vmem:[%s1 + $0x44] sm:$0xf]
      %v204 = vld [vmem:[%s1 + $0x48] sm:$0x3]
      %v205 = vld [vmem:[%s2] sm:$0x1]
      %v207 = vlaneseq
      %v208 = vshrl.u32 %v207, 7
      %v209 = vsub.s32 0, %v208
      %v210 = vrot.slane %v205, %v209
      %v220 = vunpack.c.l.b16 %v178
      %v221 = vunpack.c.h.b16 %v178
      %v222 = vunpack.c.l.b16 %v179
      %v223 = vunpack.c.h.b16 %v179
      %v224 = vunpack.c.l.b16 %v180
      %v225 = vunpack.c.h.b16 %v180
      %v226 = vunpack.c.l.b16 %v181
      %v227 = vunpack.c.h.b16 %v181
      %v228 = vunpack.c.l.b16 %v182
      %v229 = vunpack.c.h.b16 %v182
      %v230 = vunpack.c.l.b16 %v183
      %v231 = vunpack.c.h.b16 %v183
      %v232 = vunpack.c.l.b16 %v184
      %v233 = vunpack.c.h.b16 %v184
      %v234 = vunpack.c.l.b16 %v185
      %v235 = vunpack.c.h.b16 %v185
      %v236 = vpack.c.b16 %v222, %v220
      %v237 = vpack.c.b16 %v223, %v221
      %v238 = vpack.c.b16 %v226, %v224
      %v239 = vpack.c.b16 %v227, %v225
      %v240 = vpack.c.b16 %v230, %v228
      %v241 = vpack.c.b16 %v231, %v229
      %v242 = vpack.c.b16 %v234, %v232
      %v243 = vpack.c.b16 %v235, %v233
      %v267 = vunpack.c.l.b16 %v186
      %v268 = vunpack.c.l.b16 %v187
      %v269 = vunpack.c.l.b16 %v188
      %v270 = vunpack.c.l.b16 %v189
      %v271 = vunpack.c.l.b16 %v190
      %v272 = vunpack.c.l.b16 %v191
      %v273 = vunpack.c.l.b16 %v192
      %v274 = vunpack.c.l.b16 %v193
      %v275 = vunpack.c.l.b16 %v194
      %v276 = vunpack.c.l.b16 %v195
      %v277 = vunpack.c.l.b16 %v196
      %v278 = vunpack.c.l.b16 %v197
      %v279 = vunpack.c.l.b16 %v198
      %v280 = vunpack.c.l.b16 %v199
      %v281 = vunpack.c.l.b16 %v200
      %v282 = vunpack.c.l.b16 %v201
      %v283 = vunpack.c.l.b16 %v202
      %v284 = vunpack.c.l.b16 %v203
      %v285 = vunpack.c.l.b16 %v204
      %v286 = vpack.c.b16 %v268, %v267
      %v287 = vpack.c.b16 %v270, %v269
      %v288 = vpack.c.b16 %v272, %v271
      %v289 = vpack.c.b16 %v274, %v273
      %v290 = vpack.c.b16 %v276, %v275
      %v291 = vpack.c.b16 %v278, %v277
      %v292 = vpack.c.b16 %v280, %v279
      %v293 = vpack.c.b16 %v282, %v281
      %v294 = vpack.c.b16 %v284, %v283
      %v295 = vpack.c.b16 %v285, %v285
      %vm305 = vcmask 154624
      %v307 = vsel %vm305, %v237, 0
      %v310 = vsel %vm305, %v239, 0
      %v313 = vsel %vm305, %v241, 0
      %v316 = vsel %vm305, %v243, 0
      %vm318 = vcmask 1040384
      %vm319 = vcmask 1041408
      %v320 = vsel %vm318, 4294967295, 65535
      %v321 = vsel %vm319, %v320, 0
      %v323 = vand.u32 %v295, %v321
      %325 = vmatprep.subr.bf16.mxu0 0
      %326 = vmatpush1.bf16.msra.mxu0 %v286
      %327 = vmatprep.subr.bf16.mxu0 0
      %328 = vmatpush1.bf16.msra.mxu0 %v287
      %329 = vmatprep.subr.bf16.mxu0 0
      %330 = vmatpush1.bf16.msra.mxu0 %v288
      %331 = vmatprep.subr.bf16.mxu0 0
      %332 = vmatpush1.bf16.msra.mxu0 %v289
      %333 = vmatprep.subr.bf16.mxu0 0
      %334 = vmatpush1.bf16.msra.mxu0 %v290
      %335 = vmatprep.subr.bf16.mxu0 0
      %336 = vmatpush1.bf16.msra.mxu0 %v291
      %337 = vmatprep.subr.bf16.mxu0 0
      %338 = vmatpush1.bf16.msra.mxu0 %v292
      %339 = vmatprep.subr.bf16.mxu0 0
      %340 = vmatpush1.bf16.msra.mxu0 %v293
      %341 = vmatprep.subr.bf16.mxu0 0
      %342 = vmatpush1.bf16.msra.mxu0 %v294
      %343 = vmatprep.subr.bf16.mxu0 0
      %344 = vmatpush1.bf16.msra.mxu0 %v323
      %345 = vmatprep.subr.bf16.mxu0 0
      %346 = vmatpush1.bf16.msra.mxu0 0
      %347 = vmatprep.subr.bf16.mxu0 0
      %348 = vmatpush1.bf16.msra.mxu0 0
      %349 = vmatprep.subr.bf16.mxu0 0
      %350 = vmatpush1.bf16.msra.mxu0 0
      %351 = vmatprep.subr.bf16.mxu0 0
      %352 = vmatpush1.bf16.msra.mxu0 0
      %353 = vmatprep.subr.bf16.mxu0 0
      %354 = vmatpush1.bf16.msra.mxu0 0
      %355 = vmatprep.subr.bf16.mxu0 0
      %356 = vmatpush1.bf16.msra.mxu0 0
      %357 = vmatprep.mubr.bf16.mxu0 %v307
      %358 = vmatmul.mubr.bf16.gmra.mrb[0].mxu0 %v236
      %v359 = vpop.f32.mrb[0].mxu0
      %v360 = vadd.f32 %v210, %v359
      %v361 = vpop.f32.mrb[0].mxu0
      %v362 = vpop.f32.mrb[0].mxu0
      %v363 = vadd.f32 %v210, %v362
      %v364 = vpop.f32.mrb[0].mxu0
      %365 = vmatprep.mubr.bf16.mxu0 %v310
      %366 = vmatmul.mubr.bf16.gmra.mrb[0].mxu0 %v238
      %v367 = vpop.f32.mrb[0].mxu0
      %v368 = vadd.f32 %v210, %v367
      %v369 = vpop.f32.mrb[0].mxu0
      %v370 = vpop.f32.mrb[0].mxu0
      %v371 = vadd.f32 %v210, %v370
      %v372 = vpop.f32.mrb[0].mxu0
      %373 = vmatprep.mubr.bf16.mxu0 %v313
      %374 = vmatmul.mubr.bf16.gmra.mrb[0].mxu0 %v240
      %v375 = vpop.f32.mrb[0].mxu0
      %v376 = vadd.f32 %v210, %v375
      %v377 = vpop.f32.mrb[0].mxu0
      %v378 = vpop.f32.mrb[0].mxu0
      %v379 = vadd.f32 %v210, %v378
      %v380 = vpop.f32.mrb[0].mxu0
      %381 = vmatprep.mubr.bf16.mxu0 %v316
      %382 = vmatmul.mubr.bf16.gmra.mrb[0].mxu0 %v242
      %v383 = vpop.f32.mrb[0].mxu0
      %v384 = vadd.f32 %v210, %v383
      %v385 = vpop.f32.mrb[0].mxu0
      %v386 = vpop.f32.mrb[0].mxu0
      %v387 = vadd.f32 %v210, %v386
      %v388 = vpop.f32.mrb[0].mxu0
      %389 = vdwg.mxu0
      %v390 = vmax.f32 %v360, 0.0
      %v391 = vmax.f32 %v363, 0.0
      %v392 = vmax.f32 %v368, 0.0
      %v393 = vmax.f32 %v371, 0.0
      %v394 = vmax.f32 %v376, 0.0
      %v395 = vmax.f32 %v379, 0.0
      %v396 = vmax.f32 %v384, 0.0
      %v397 = vmax.f32 %v387, 0.0
      %v398 = vlaneseq
      %v399 = vshrl.u32 %v398, 7
      %vm400 = vcmp.eq.s32.totalorder %v399, 0
      %v409 = vrot.slane %v390, 3
      %v410 = vrot.slane %v391, 3
      %v411 = vrot.slane %v392, 3
      %v412 = vrot.slane %v393, 3
      %v413 = vrot.slane %v394, 3
      %v414 = vrot.slane %v395, 3
      %v415 = vrot.slane %v396, 3
      %v416 = vrot.slane %v397, 3
      %v425 = vsel %vm400, 0.0, %v409
      %v426 = vsel %vm400, 0.0, %v410
      %v427 = vsel %vm400, 0.0, %v411
      %v428 = vsel %vm400, 0.0, %v412
      %v429 = vsel %vm400, 0.0, %v413
      %v430 = vsel %vm400, 0.0, %v414
      %v431 = vsel %vm400, 0.0, %v415
      %v432 = vsel %vm400, 0.0, %v416
      %v433 = vrot.slane %v390, 4
      %v434 = vrot.slane %v391, 4
      %v435 = vrot.slane %v392, 4
      %v436 = vrot.slane %v393, 4
      %v437 = vrot.slane %v394, 4
      %v438 = vrot.slane %v395, 4
      %v439 = vrot.slane %v396, 4
      %v440 = vrot.slane %v397, 4
      %v449 = vmax.f32 %v390, %v433
      %v450 = vmax.f32 %v391, %v434
      %v451 = vmax.f32 %v392, %v435
      %v452 = vmax.f32 %v393, %v436
      %v453 = vmax.f32 %v394, %v437
      %v454 = vmax.f32 %v395, %v438
      %v455 = vmax.f32 %v396, %v439
      %v456 = vmax.f32 %v397, %v440
      %v457 = vmax.f32 %v449, %v425
      %v458 = vmax.f32 %v450, %v426
      %v459 = vmax.f32 %v451, %v427
      %v460 = vmax.f32 %v452, %v428
      %v461 = vmax.f32 %v453, %v429
      %v462 = vmax.f32 %v454, %v430
      %v463 = vmax.f32 %v455, %v431
      %v464 = vmax.f32 %v456, %v432
      %vm465 = vcmask 519168
      %466 = vst.msk [vmem:[%s175] sm:$0xf] %vm465, %v457
      %467 = vst.msk [vmem:[%s175 + $0x4] sm:$0xf] %vm465, %v458
      %468 = vst.msk [vmem:[%s175 + $0x8] sm:$0xf] %vm465, %v459
      %469 = vst.msk [vmem:[%s175 + $0xc] sm:$0xf] %vm465, %v460
      %470 = vst.msk [vmem:[%s175 + $0x10] sm:$0xf] %vm465, %v461
      %471 = vst.msk [vmem:[%s175 + $0x14] sm:$0xf] %vm465, %v462
      %472 = vst.msk [vmem:[%s175 + $0x18] sm:$0xf] %vm465, %v463
      %473 = vst.msk [vmem:[%s175 + $0x1c] sm:$0xf] %vm465, %v464
      %s474 = smul.u32 8, %s14
      %p475 = scmp.lt.s32.totalorder %s474, 15
      %s476 = scalar_select %p475, %s474, 15
      %s477 = smul.addr %s476, 4
      %s478 = scalar_lea.vmem %s3, %s477
      // Predicated region
      $region33: #{basic_stem_forward.2} parent=31 // pred_check
        %p479 = pneg %p100
      $region34: #{basic_stem_forward.2} parent=31 // pred_check_branch
        %481 = sbr.rel (%p479) target = $region36
      $region35: #{basic_stem_forward.2} parent=31 // pred_region
        %s482 = smul.u32 8, %s14
      $region36: #{basic_stem_forward.2} parent=31 // pred_fallthru
        _
    $region32: #{basic_stem_forward.2} parent=5 // pred_fallthru
      _
    %p483 = scmp.le.s32.totalorder 2, %s9
    // Predicated region
    $region37: #{basic_stem_forward.2} parent=5 // pred_check
      %p484 = pneg %p483
    $region38: #{basic_stem_forward.2} parent=5 // pred_check_branch
      %486 = sbr.rel (%p484) target = $region40
    $region39: #{basic_stem_forward.2} parent=5 // pred_region
      %s487 = ssub.s32 %s9, 2
      // Predicated region
      $region41: #{basic_stem_forward.2} parent=39 // pred_check
        %p488 = pneg %p106
      $region42: #{basic_stem_forward.2} parent=39 // pred_check_branch
        %490 = sbr.rel (%p488) target = $region44
      $region43: #{basic_stem_forward.2} parent=39 // pred_region
        %s491 = smul.u32 8, %s15
        %p492 = scmp.lt.s32.totalorder %s491, 15
        %s493 = scalar_select %p492, %s491, 15
        %s494 = smul.addr %s493, 4
        %s495 = scalar_lea.vmem %s3, %s494
      $region44: #{basic_stem_forward.2} parent=39 // pred_fallthru
        _
    $region40: #{basic_stem_forward.2} parent=5 // pred_fallthru
      _
  $region6: #{basic_stem_forward.2} parent=0 // loop_footer
    %s13 = sadd.s32 1, %s9
  $region7: #{basic_stem_forward.2} parent=0 // loop_footer_branch
    %8 = sbr.rel target = $region3
  $region8: #{basic_stem_forward.2} parent=0 // loop_exit
    _

</llo_original>
